<compile_context>
chip_gen: v5e
topology: v5e:2x2
jax: 0.10.0
libtpu: 0.0.40
codegen_flags: <defaults>
</compile_context>

<pallas_src>
import jax
import jax.numpy as jnp
import numpy as np
from jax.experimental import pallas as pl
from jax.experimental.pallas import tpu as pltpu


def mlp_kernel(x_ref, w1_ref, b1_ref, w2_ref, b2_ref, o_ref):
    x = x_ref[...]            # (D_in, TB)  -- batch on the 128-lane axis
    w1 = w1_ref[...]          # (H, D_in)   -- PyTorch-native nn.Linear layout
    w2 = w2_ref[...]          # (O, H)
    d_in = x.shape[0]
    hidden = w1.shape[0]
    n_out = w2.shape[0]

    # ---- Layer 1: h = W1 @ x + b1, sigmoid ---------------------------------
    # Tiny contraction (D_in=4): unrolled broadcast-FMA on the VPU, exact f32,
    # no MXU push/pop round-trip.
    h = w1[:, 0:1] * x[0:1, :]                       # (H, TB)
    for k in range(1, d_in):
        h = h + w1[:, k:k + 1] * x[k:k + 1, :]
    h = h + b1_ref[...]                              # bias bcast (H, 1)
    h = 1.0 / (1.0 + jnp.exp(-h))                    # sigmoid (EUP exp + div)

    # ---- Layer 2: z = W2 @ h + b2 ------------------------------------------
    z = w2[:, 0:1] * h[0:1, :]                       # (O, TB)
    for k in range(1, hidden):
        z = z + w2[:, k:k + 1] * h[k:k + 1, :]
    z = z + b2_ref[...]                              # bias bcast (O, 1)

    # ---- Softmax over the O (=3) logit rows, per batch column ---------------
    # Explicit row-wise max/sum: stays on the VPU instead of an XLU cross-lane
    # reduce; lane (batch) axis stays fully dense.
    m = z[0:1, :]
    for r in range(1, n_out):
        m = jnp.maximum(m, z[r:r + 1, :])
    e = jnp.exp(z - m)
    s = e[0:1, :]
    for r in range(1, n_out):
        s = s + e[r:r + 1, :]
    # Exact divide (approx reciprocal's ~2^-12 rel error failed the 1e-5 check).
    o_ref[...] = (e / s).astype(o_ref.dtype)


def mlp_forward(x, w1, b1, w2, b2, *, tile_b=1024):
    """x: (B, D_in) f32; w1: (H, D_in); b1: (H,); w2: (O, H); b2: (O,).

    Returns softmax(sigmoid(x @ w1.T + b1) @ w2.T + b2, axis=1), shape (B, O).
    """
    B, D_in = x.shape
    H = w1.shape[0]
    O = w2.shape[0]

    x_t = x.T                     # (D_in, B): batch on the lane axis
    b1c = b1.reshape(H, 1)
    b2c = b2.reshape(O, 1)

    if B <= tile_b:
        tb = B                    # single grid step, block == full array dims
    else:
        tb = max(128, (tile_b // 128) * 128)   # lane-dim tiles must be %128
    grid = (pl.cdiv(B, tb),)      # partial last block is clipped by Pallas;
                                  # columns are independent so tail garbage is
                                  # computed but never written back.

    flops = 2 * B * (D_in * H + H * O)
    transcendentals = B * (H + O)
    bytes_accessed = 4 * (x.size + B * O + w1.size + w2.size + H + O)

    out_t = pl.pallas_call(
        mlp_kernel,
        out_shape=jax.ShapeDtypeStruct((O, B), jnp.float32),
        grid_spec=pltpu.PrefetchScalarGridSpec(
            num_scalar_prefetch=0,
            grid=grid,
            in_specs=[
                pl.BlockSpec((D_in, tb), lambda i: (0, i)),   # streamed x cols
                pl.BlockSpec((H, D_in), lambda i: (0, 0)),    # resident weights
                pl.BlockSpec((H, 1), lambda i: (0, 0)),
                pl.BlockSpec((O, H), lambda i: (0, 0)),
                pl.BlockSpec((O, 1), lambda i: (0, 0)),
            ],
            out_specs=pl.BlockSpec((O, tb), lambda i: (0, i)),
        ),
        compiler_params=pltpu.CompilerParams(
            dimension_semantics=("parallel",),   # lets v7x split grid over 2 TCs
        ),
        cost_estimate=pl.CostEstimate(
            flops=flops,
            transcendentals=transcendentals,
            bytes_accessed=bytes_accessed,
        ),
    )(x_t, w1, b1c, w2, b2c)

    return out_t.T                # (B, O), single wrapper-side transpose


def _ref_numpy(x, w1, b1, w2, b2):
    """float64 numpy reference (PyTorch semantics: y = x @ W.T + b)."""
    xn = np.asarray(x, np.float64)
    w1n = np.asarray(w1, np.float64)
    b1n = np.asarray(b1, np.float64)
    w2n = np.asarray(w2, np.float64)
    b2n = np.asarray(b2, np.float64)
    h = 1.0 / (1.0 + np.exp(-(xn @ w1n.T + b1n)))
    z = h @ w2n.T + b2n
    z = z - z.max(axis=1, keepdims=True)
    e = np.exp(z)
    return e / e.sum(axis=1, keepdims=True)


if __name__ == "__main__":
    # Shapes implied by the module: input_size = 4 (Iris-style features),
    # hidden_size = 16, output_size = 3.
    batch, input_size, hidden_size, output_size = 256, 4, 16, 3

    key = jax.random.PRNGKey(0)
    kx, kw1, kb1, kw2, kb2, kxb = jax.random.split(key, 6)

    x = jax.random.normal(kx, (batch, input_size), dtype=jnp.float32)

    # PyTorch-style uniform(-1/sqrt(fan_in), +1/sqrt(fan_in)) init,
    # weights kept in native nn.Linear (out_features, in_features) layout.
    bound1 = 1.0 / (input_size ** 0.5)
    w1 = jax.random.uniform(kw1, (hidden_size, input_size), jnp.float32,
                            -bound1, bound1)
    b1 = jax.random.uniform(kb1, (hidden_size,), jnp.float32, -bound1, bound1)
    bound2 = 1.0 / (hidden_size ** 0.5)
    w2 = jax.random.uniform(kw2, (output_size, hidden_size), jnp.float32,
                            -bound2, bound2)
    b2 = jax.random.uniform(kb2, (output_size,), jnp.float32, -bound2, bound2)

    # Single-step path (whole batch in one grid step).
    out = jax.block_until_ready(mlp_forward(x, w1, b1, w2, b2))
    ref = _ref_numpy(x, w1, b1, w2, b2)
    assert out.shape == (batch, output_size)
    assert np.allclose(np.asarray(out), ref, atol=1e-5), "mismatch vs reference"
    assert np.allclose(np.asarray(out).sum(axis=1), 1.0, atol=1e-5)

    # Multi-step path with a partial (clipped) last block: 1280 = 2*512 + 256.
    xb = jax.random.normal(kxb, (1280, input_size), dtype=jnp.float32)
    out_b = jax.block_until_ready(mlp_forward(xb, w1, b1, w2, b2, tile_b=512))
    ref_b = _ref_numpy(xb, w1, b1, w2, b2)
    assert np.allclose(np.asarray(out_b), ref_b, atol=1e-5), "mismatch (tiled)"

    # Tiny-batch single-tile path.
    small = jax.block_until_ready(mlp_forward(x[:8], w1, b1, w2, b2))
    assert np.allclose(np.asarray(small), ref[:8], atol=1e-5), "mismatch (small)"

    print("KERNEL_OK")
</pallas_src>

<mosaic_0001>
module attributes {stable_mosaic.version = 11 : i64} {
  func.func @mlp_kernel(%arg0: i32, %arg1: memref<4x256xf32, #tpu.memory_space<vmem>>, %arg2: memref<16x4xf32, #tpu.memory_space<vmem>>, %arg3: memref<16x1xf32, #tpu.memory_space<vmem>>, %arg4: memref<3x16xf32, #tpu.memory_space<vmem>>, %arg5: memref<3x1xf32, #tpu.memory_space<vmem>>, %arg6: memref<3x256xf32, #tpu.memory_space<vmem>>) attributes {dimension_semantics = [#tpu.dimension_semantics<parallel>], iteration_bounds = array<i64: 1>, scalar_prefetch = 0 : i64, scratch_operands = 0 : i64, tpu.core_type = #tpu.core_type<tc>, window_params = [{transform_indices = @transform_0, window_bounds = array<i64: 4, 256>}, {pipeline_mode = #tpu.pipeline_mode<synchronous>, transform_indices = @transform_1, window_bounds = array<i64: 16, 4>}, {pipeline_mode = #tpu.pipeline_mode<synchronous>, transform_indices = @transform_2, window_bounds = array<i64: 16, 1>}, {pipeline_mode = #tpu.pipeline_mode<synchronous>, transform_indices = @transform_3, window_bounds = array<i64: 3, 16>}, {pipeline_mode = #tpu.pipeline_mode<synchronous>, transform_indices = @transform_4, window_bounds = array<i64: 3, 1>}, {transform_indices = @transform_5, window_bounds = array<i64: 3, 256>}]} {
    %c0 = arith.constant 0 : index
    %c0_0 = arith.constant 0 : index
    %0 = vector.load %arg1[%c0, %c0_0] : memref<4x256xf32, #tpu.memory_space<vmem>>, vector<4x256xf32>
    %c0_1 = arith.constant 0 : index
    %c0_2 = arith.constant 0 : index
    %1 = vector.load %arg2[%c0_1, %c0_2] : memref<16x4xf32, #tpu.memory_space<vmem>>, vector<16x4xf32>
    %c0_3 = arith.constant 0 : index
    %c0_4 = arith.constant 0 : index
    %2 = vector.load %arg4[%c0_3, %c0_4] : memref<3x16xf32, #tpu.memory_space<vmem>>, vector<3x16xf32>
    %3 = vector.extract_strided_slice %1 {offsets = [0, 0], sizes = [16, 1], strides = [1, 1]} : vector<16x4xf32> to vector<16x1xf32>
    %4 = vector.extract_strided_slice %0 {offsets = [0, 0], sizes = [1, 256], strides = [1, 1]} : vector<4x256xf32> to vector<1x256xf32>
    %5 = vector.broadcast %3 : vector<16x1xf32> to vector<16x256xf32>
    %6 = vector.broadcast %4 : vector<1x256xf32> to vector<16x256xf32>
    %7 = arith.mulf %5, %6 : vector<16x256xf32>
    %8 = vector.extract_strided_slice %1 {offsets = [0, 1], sizes = [16, 1], strides = [1, 1]} : vector<16x4xf32> to vector<16x1xf32>
    %9 = vector.extract_strided_slice %0 {offsets = [1, 0], sizes = [1, 256], strides = [1, 1]} : vector<4x256xf32> to vector<1x256xf32>
    %10 = vector.broadcast %8 : vector<16x1xf32> to vector<16x256xf32>
    %11 = vector.broadcast %9 : vector<1x256xf32> to vector<16x256xf32>
    %12 = arith.mulf %10, %11 : vector<16x256xf32>
    %13 = arith.addf %7, %12 : vector<16x256xf32>
    %14 = vector.extract_strided_slice %1 {offsets = [0, 2], sizes = [16, 1], strides = [1, 1]} : vector<16x4xf32> to vector<16x1xf32>
    %15 = vector.extract_strided_slice %0 {offsets = [2, 0], sizes = [1, 256], strides = [1, 1]} : vector<4x256xf32> to vector<1x256xf32>
    %16 = vector.broadcast %14 : vector<16x1xf32> to vector<16x256xf32>
    %17 = vector.broadcast %15 : vector<1x256xf32> to vector<16x256xf32>
    %18 = arith.mulf %16, %17 : vector<16x256xf32>
    %19 = arith.addf %13, %18 : vector<16x256xf32>
    %20 = vector.extract_strided_slice %1 {offsets = [0, 3], sizes = [16, 1], strides = [1, 1]} : vector<16x4xf32> to vector<16x1xf32>
    %21 = vector.extract_strided_slice %0 {offsets = [3, 0], sizes = [1, 256], strides = [1, 1]} : vector<4x256xf32> to vector<1x256xf32>
    %22 = vector.broadcast %20 : vector<16x1xf32> to vector<16x256xf32>
    %23 = vector.broadcast %21 : vector<1x256xf32> to vector<16x256xf32>
    %24 = arith.mulf %22, %23 : vector<16x256xf32>
    %25 = arith.addf %19, %24 : vector<16x256xf32>
    %c0_5 = arith.constant 0 : index
    %c0_6 = arith.constant 0 : index
    %26 = vector.load %arg3[%c0_5, %c0_6] : memref<16x1xf32, #tpu.memory_space<vmem>>, vector<16x1xf32>
    %27 = vector.broadcast %26 : vector<16x1xf32> to vector<16x256xf32>
    %28 = arith.addf %25, %27 : vector<16x256xf32>
    %cst = arith.constant 0.000000e+00 : f32
    %29 = vector.broadcast %cst : f32 to vector<16x256xf32>
    %30 = arith.subf %29, %28 : vector<16x256xf32>
    %31 = math.exp %30 : vector<16x256xf32>
    %cst_7 = arith.constant 1.000000e+00 : f32
    %32 = vector.broadcast %cst_7 : f32 to vector<16x256xf32>
    %33 = arith.addf %32, %31 : vector<16x256xf32>
    %cst_8 = arith.constant 1.000000e+00 : f32
    %34 = vector.broadcast %cst_8 : f32 to vector<16x256xf32>
    %35 = arith.divf %34, %33 : vector<16x256xf32>
    %36 = vector.extract_strided_slice %2 {offsets = [0, 0], sizes = [3, 1], strides = [1, 1]} : vector<3x16xf32> to vector<3x1xf32>
    %37 = vector.extract_strided_slice %35 {offsets = [0, 0], sizes = [1, 256], strides = [1, 1]} : vector<16x256xf32> to vector<1x256xf32>
    %38 = vector.broadcast %36 : vector<3x1xf32> to vector<3x256xf32>
    %39 = vector.broadcast %37 : vector<1x256xf32> to vector<3x256xf32>
    %40 = arith.mulf %38, %39 : vector<3x256xf32>
    %41 = vector.extract_strided_slice %2 {offsets = [0, 1], sizes = [3, 1], strides = [1, 1]} : vector<3x16xf32> to vector<3x1xf32>
    %42 = vector.extract_strided_slice %35 {offsets = [1, 0], sizes = [1, 256], strides = [1, 1]} : vector<16x256xf32> to vector<1x256xf32>
    %43 = vector.broadcast %41 : vector<3x1xf32> to vector<3x256xf32>
    %44 = vector.broadcast %42 : vector<1x256xf32> to vector<3x256xf32>
    %45 = arith.mulf %43, %44 : vector<3x256xf32>
    %46 = arith.addf %40, %45 : vector<3x256xf32>
    %47 = vector.extract_strided_slice %2 {offsets = [0, 2], sizes = [3, 1], strides = [1, 1]} : vector<3x16xf32> to vector<3x1xf32>
    %48 = vector.extract_strided_slice %35 {offsets = [2, 0], sizes = [1, 256], strides = [1, 1]} : vector<16x256xf32> to vector<1x256xf32>
    %49 = vector.broadcast %47 : vector<3x1xf32> to vector<3x256xf32>
    %50 = vector.broadcast %48 : vector<1x256xf32> to vector<3x256xf32>
    %51 = arith.mulf %49, %50 : vector<3x256xf32>
    %52 = arith.addf %46, %51 : vector<3x256xf32>
    %53 = vector.extract_strided_slice %2 {offsets = [0, 3], sizes = [3, 1], strides = [1, 1]} : vector<3x16xf32> to vector<3x1xf32>
    %54 = vector.extract_strided_slice %35 {offsets = [3, 0], sizes = [1, 256], strides = [1, 1]} : vector<16x256xf32> to vector<1x256xf32>
    %55 = vector.broadcast %53 : vector<3x1xf32> to vector<3x256xf32>
    %56 = vector.broadcast %54 : vector<1x256xf32> to vector<3x256xf32>
    %57 = arith.mulf %55, %56 : vector<3x256xf32>
    %58 = arith.addf %52, %57 : vector<3x256xf32>
    %59 = vector.extract_strided_slice %2 {offsets = [0, 4], sizes = [3, 1], strides = [1, 1]} : vector<3x16xf32> to vector<3x1xf32>
    %60 = vector.extract_strided_slice %35 {offsets = [4, 0], sizes = [1, 256], strides = [1, 1]} : vector<16x256xf32> to vector<1x256xf32>
    %61 = vector.broadcast %59 : vector<3x1xf32> to vector<3x256xf32>
    %62 = vector.broadcast %60 : vector<1x256xf32> to vector<3x256xf32>
    %63 = arith.mulf %61, %62 : vector<3x256xf32>
    %64 = arith.addf %58, %63 : vector<3x256xf32>
    %65 = vector.extract_strided_slice %2 {offsets = [0, 5], sizes = [3, 1], strides = [1, 1]} : vector<3x16xf32> to vector<3x1xf32>
    %66 = vector.extract_strided_slice %35 {offsets = [5, 0], sizes = [1, 256], strides = [1, 1]} : vector<16x256xf32> to vector<1x256xf32>
    %67 = vector.broadcast %65 : vector<3x1xf32> to vector<3x256xf32>
    %68 = vector.broadcast %66 : vector<1x256xf32> to vector<3x256xf32>
    %69 = arith.mulf %67, %68 : vector<3x256xf32>
    %70 = arith.addf %64, %69 : vector<3x256xf32>
    %71 = vector.extract_strided_slice %2 {offsets = [0, 6], sizes = [3, 1], strides = [1, 1]} : vector<3x16xf32> to vector<3x1xf32>
    %72 = vector.extract_strided_slice %35 {offsets = [6, 0], sizes = [1, 256], strides = [1, 1]} : vector<16x256xf32> to vector<1x256xf32>
    %73 = vector.broadcast %71 : vector<3x1xf32> to vector<3x256xf32>
    %74 = vector.broadcast %72 : vector<1x256xf32> to vector<3x256xf32>
    %75 = arith.mulf %73, %74 : vector<3x256xf32>
    %76 = arith.addf %70, %75 : vector<3x256xf32>
    %77 = vector.extract_strided_slice %2 {offsets = [0, 7], sizes = [3, 1], strides = [1, 1]} : vector<3x16xf32> to vector<3x1xf32>
    %78 = vector.extract_strided_slice %35 {offsets = [7, 0], sizes = [1, 256], strides = [1, 1]} : vector<16x256xf32> to vector<1x256xf32>
    %79 = vector.broadcast %77 : vector<3x1xf32> to vector<3x256xf32>
    %80 = vector.broadcast %78 : vector<1x256xf32> to vector<3x256xf32>
    %81 = arith.mulf %79, %80 : vector<3x256xf32>
    %82 = arith.addf %76, %81 : vector<3x256xf32>
    %83 = vector.extract_strided_slice %2 {offsets = [0, 8], sizes = [3, 1], strides = [1, 1]} : vector<3x16xf32> to vector<3x1xf32>
    %84 = vector.extract_strided_slice %35 {offsets = [8, 0], sizes = [1, 256], strides = [1, 1]} : vector<16x256xf32> to vector<1x256xf32>
    %85 = vector.broadcast %83 : vector<3x1xf32> to vector<3x256xf32>
    %86 = vector.broadcast %84 : vector<1x256xf32> to vector<3x256xf32>
    %87 = arith.mulf %85, %86 : vector<3x256xf32>
    %88 = arith.addf %82, %87 : vector<3x256xf32>
    %89 = vector.extract_strided_slice %2 {offsets = [0, 9], sizes = [3, 1], strides = [1, 1]} : vector<3x16xf32> to vector<3x1xf32>
    %90 = vector.extract_strided_slice %35 {offsets = [9, 0], sizes = [1, 256], strides = [1, 1]} : vector<16x256xf32> to vector<1x256xf32>
    %91 = vector.broadcast %89 : vector<3x1xf32> to vector<3x256xf32>
    %92 = vector.broadcast %90 : vector<1x256xf32> to vector<3x256xf32>
    %93 = arith.mulf %91, %92 : vector<3x256xf32>
    %94 = arith.addf %88, %93 : vector<3x256xf32>
    %95 = vector.extract_strided_slice %2 {offsets = [0, 10], sizes = [3, 1], strides = [1, 1]} : vector<3x16xf32> to vector<3x1xf32>
    %96 = vector.extract_strided_slice %35 {offsets = [10, 0], sizes = [1, 256], strides = [1, 1]} : vector<16x256xf32> to vector<1x256xf32>
    %97 = vector.broadcast %95 : vector<3x1xf32> to vector<3x256xf32>
    %98 = vector.broadcast %96 : vector<1x256xf32> to vector<3x256xf32>
    %99 = arith.mulf %97, %98 : vector<3x256xf32>
    %100 = arith.addf %94, %99 : vector<3x256xf32>
    %101 = vector.extract_strided_slice %2 {offsets = [0, 11], sizes = [3, 1], strides = [1, 1]} : vector<3x16xf32> to vector<3x1xf32>
    %102 = vector.extract_strided_slice %35 {offsets = [11, 0], sizes = [1, 256], strides = [1, 1]} : vector<16x256xf32> to vector<1x256xf32>
    %103 = vector.broadcast %101 : vector<3x1xf32> to vector<3x256xf32>
    %104 = vector.broadcast %102 : vector<1x256xf32> to vector<3x256xf32>
    %105 = arith.mulf %103, %104 : vector<3x256xf32>
    %106 = arith.addf %100, %105 : vector<3x256xf32>
    %107 = vector.extract_strided_slice %2 {offsets = [0, 12], sizes = [3, 1], strides = [1, 1]} : vector<3x16xf32> to vector<3x1xf32>
    %108 = vector.extract_strided_slice %35 {offsets = [12, 0], sizes = [1, 256], strides = [1, 1]} : vector<16x256xf32> to vector<1x256xf32>
    %109 = vector.broadcast %107 : vector<3x1xf32> to vector<3x256xf32>
    %110 = vector.broadcast %108 : vector<1x256xf32> to vector<3x256xf32>
    %111 = arith.mulf %109, %110 : vector<3x256xf32>
    %112 = arith.addf %106, %111 : vector<3x256xf32>
    %113 = vector.extract_strided_slice %2 {offsets = [0, 13], sizes = [3, 1], strides = [1, 1]} : vector<3x16xf32> to vector<3x1xf32>
    %114 = vector.extract_strided_slice %35 {offsets = [13, 0], sizes = [1, 256], strides = [1, 1]} : vector<16x256xf32> to vector<1x256xf32>
    %115 = vector.broadcast %113 : vector<3x1xf32> to vector<3x256xf32>
    %116 = vector.broadcast %114 : vector<1x256xf32> to vector<3x256xf32>
    %117 = arith.mulf %115, %116 : vector<3x256xf32>
    %118 = arith.addf %112, %117 : vector<3x256xf32>
    %119 = vector.extract_strided_slice %2 {offsets = [0, 14], sizes = [3, 1], strides = [1, 1]} : vector<3x16xf32> to vector<3x1xf32>
    %120 = vector.extract_strided_slice %35 {offsets = [14, 0], sizes = [1, 256], strides = [1, 1]} : vector<16x256xf32> to vector<1x256xf32>
    %121 = vector.broadcast %119 : vector<3x1xf32> to vector<3x256xf32>
    %122 = vector.broadcast %120 : vector<1x256xf32> to vector<3x256xf32>
    %123 = arith.mulf %121, %122 : vector<3x256xf32>
    %124 = arith.addf %118, %123 : vector<3x256xf32>
    %125 = vector.extract_strided_slice %2 {offsets = [0, 15], sizes = [3, 1], strides = [1, 1]} : vector<3x16xf32> to vector<3x1xf32>
    %126 = vector.extract_strided_slice %35 {offsets = [15, 0], sizes = [1, 256], strides = [1, 1]} : vector<16x256xf32> to vector<1x256xf32>
    %127 = vector.broadcast %125 : vector<3x1xf32> to vector<3x256xf32>
    %128 = vector.broadcast %126 : vector<1x256xf32> to vector<3x256xf32>
    %129 = arith.mulf %127, %128 : vector<3x256xf32>
    %130 = arith.addf %124, %129 : vector<3x256xf32>
    %c0_9 = arith.constant 0 : index
    %c0_10 = arith.constant 0 : index
    %131 = vector.load %arg5[%c0_9, %c0_10] : memref<3x1xf32, #tpu.memory_space<vmem>>, vector<3x1xf32>
    %132 = vector.broadcast %131 : vector<3x1xf32> to vector<3x256xf32>
    %133 = arith.addf %130, %132 : vector<3x256xf32>
    %134 = vector.extract_strided_slice %133 {offsets = [0, 0], sizes = [1, 256], strides = [1, 1]} : vector<3x256xf32> to vector<1x256xf32>
    %135 = vector.extract_strided_slice %133 {offsets = [1, 0], sizes = [1, 256], strides = [1, 1]} : vector<3x256xf32> to vector<1x256xf32>
    %136 = arith.maximumf %134, %135 : vector<1x256xf32>
    %137 = vector.extract_strided_slice %133 {offsets = [2, 0], sizes = [1, 256], strides = [1, 1]} : vector<3x256xf32> to vector<1x256xf32>
    %138 = arith.maximumf %136, %137 : vector<1x256xf32>
    %139 = vector.broadcast %138 : vector<1x256xf32> to vector<3x256xf32>
    %140 = arith.subf %133, %139 : vector<3x256xf32>
    %141 = math.exp %140 : vector<3x256xf32>
    %142 = vector.extract_strided_slice %141 {offsets = [0, 0], sizes = [1, 256], strides = [1, 1]} : vector<3x256xf32> to vector<1x256xf32>
    %143 = vector.extract_strided_slice %141 {offsets = [1, 0], sizes = [1, 256], strides = [1, 1]} : vector<3x256xf32> to vector<1x256xf32>
    %144 = arith.addf %142, %143 : vector<1x256xf32>
    %145 = vector.extract_strided_slice %141 {offsets = [2, 0], sizes = [1, 256], strides = [1, 1]} : vector<3x256xf32> to vector<1x256xf32>
    %146 = arith.addf %144, %145 : vector<1x256xf32>
    %147 = vector.broadcast %146 : vector<1x256xf32> to vector<3x256xf32>
    %148 = arith.divf %141, %147 : vector<3x256xf32>
    %c0_11 = arith.constant 0 : index
    %c0_12 = arith.constant 0 : index
    %149 = vector.load %arg6[%c0_11, %c0_12] : memref<3x256xf32, #tpu.memory_space<vmem>>, vector<3x256xf32>
    tpu.vector_store %arg6[%c0_11, %c0_12], %148 {strides = array<i32>} : memref<3x256xf32, #tpu.memory_space<vmem>>, vector<3x256xf32>,
    return
  }
  func.func @transform_0(%arg0: i32) -> (i32, i32) {
    %c0_i32 = arith.constant 0 : i32
    %c0_i32_0 = arith.constant 0 : i32
    return %c0_i32, %arg0 : i32, i32
  }
  func.func @transform_1(%arg0: i32) -> (i32, i32) {
    %c0_i32 = arith.constant 0 : i32
    %c0_i32_0 = arith.constant 0 : i32
    %c0_i32_1 = arith.constant 0 : i32
    return %c0_i32, %c0_i32_0 : i32, i32
  }
  func.func @transform_2(%arg0: i32) -> (i32, i32) {
    %c0_i32 = arith.constant 0 : i32
    %c0_i32_0 = arith.constant 0 : i32
    %c0_i32_1 = arith.constant 0 : i32
    return %c0_i32, %c0_i32_0 : i32, i32
  }
  func.func @transform_3(%arg0: i32) -> (i32, i32) {
    %c0_i32 = arith.constant 0 : i32
    %c0_i32_0 = arith.constant 0 : i32
    %c0_i32_1 = arith.constant 0 : i32
    return %c0_i32, %c0_i32_0 : i32, i32
  }
  func.func @transform_4(%arg0: i32) -> (i32, i32) {
    %c0_i32 = arith.constant 0 : i32
    %c0_i32_0 = arith.constant 0 : i32
    %c0_i32_1 = arith.constant 0 : i32
    return %c0_i32, %c0_i32_0 : i32, i32
  }
  func.func @transform_5(%arg0: i32) -> (i32, i32) {
    %c0_i32 = arith.constant 0 : i32
    %c0_i32_0 = arith.constant 0 : i32
    return %c0_i32, %arg0 : i32, i32
  }
}

</mosaic_0001>

<llo_original>
// kernel: tpu_custom_call.1
$region0: #{tpu_custom_call.1}
  #allocation0 [shape = 'u32[]', space=smem, size = 0x4, offset = 0x4, fixed_abs, tag = 'smem constant byte address 0x4 - core index']
  #allocation1 [shape = 'u32[72,128]{1,0:T(1,128)}', space=vmem, size = 0x9000, scoped, tag = 'internal scratch']
  %s0 = inlined_call_operand.vmem [shape: f32[4,256], index: 0, kind: input, shape index: {}]
  %s1 = inlined_call_operand.vmem [shape: f32[16,4], index: 1, kind: input, shape index: {}]
  %s2 = inlined_call_operand.vmem [shape: f32[16,1], index: 2, kind: input, shape index: {}]
  %s3 = inlined_call_operand.vmem [shape: f32[3,16], index: 3, kind: input, shape index: {}]
  %s4 = inlined_call_operand.vmem [shape: f32[3,1], index: 4, kind: input, shape index: {}]
  %s5 = inlined_call_operand.hbm [shape: f32[3,256], index: 5, kind: output, shape index: {}]
  %s6 = sld [smem:[#allocation0]]
  $region30: #{tpu_custom_call.1} parent=0
    _
  %s8 = ssub.s32 1, %s6
  %s9 = scalar_select 0, %s8, %s6
  $region1: #{tpu_custom_call.1} parent=0
    #allocation2 [shape = 'u8[4096]{0}', space=vmem, size = 0x1000, scoped, tag = 'output window, operand 0, single buffered']
    #allocation3 [shape = 's32[1]{0}', space=sflag, size = 0x4, scoped, tag = 'scoped memory for tpu_custom_call.1']
    %10 = vsyncpa [#allocation3], 0
    // Predicated region
    $region2: #{tpu_custom_call.1} parent=1 // pred_check
      _
    $region3: #{tpu_custom_call.1} parent=1 // pred_check_branch
      %12 = sbr.rel (0) target = $region5
    $region4: #{tpu_custom_call.1} parent=1 // pred_region
      _
    $region5: #{tpu_custom_call.1} parent=1 // pred_fallthru
      _
    // Predicated region
    $region6: #{tpu_custom_call.1} parent=1 // pred_check
      _
    $region7: #{tpu_custom_call.1} parent=1 // pred_check_branch
      %14 = sbr.rel (0) target = $region9
    $region8: #{tpu_custom_call.1} parent=1 // pred_region
      _
    $region9: #{tpu_custom_call.1} parent=1 // pred_fallthru
      _
    // Predicated region
    $region10: #{tpu_custom_call.1} parent=1 // pred_check
      _
    $region11: #{tpu_custom_call.1} parent=1 // pred_check_branch
      %16 = sbr.rel (0) target = $region13
    $region12: #{tpu_custom_call.1} parent=1 // pred_region
      _
    $region13: #{tpu_custom_call.1} parent=1 // pred_fallthru
      _
    // Predicated region
    $region14: #{tpu_custom_call.1} parent=1 // pred_check
      _
    $region15: #{tpu_custom_call.1} parent=1 // pred_check_branch
      %18 = sbr.rel (0) target = $region17
    $region16: #{tpu_custom_call.1} parent=1 // pred_region
      _
    $region17: #{tpu_custom_call.1} parent=1 // pred_fallthru
      _
    // Predicated region
    $region18: #{tpu_custom_call.1} parent=1 // pred_check
      _
    $region19: #{tpu_custom_call.1} parent=1 // pred_check_branch
      %20 = sbr.rel (0) target = $region21
    $region20: #{tpu_custom_call.1} parent=1 // pred_region
      _
    $region21: #{tpu_custom_call.1} parent=1 // pred_fallthru
      _
    %v21 = vld [vmem:[%s0] sm:$0xff]
    %v22 = vld [vmem:[%s1] sm:$0xff]
    %v23 = vld [vmem:[%s1 + $0x8] sm:$0xff]
    %v24 = vld [vmem:[%s3] sm:$0x7]
    %26 = vset.pattern.permute.xlu0 0
    %27 = vperm.xlu0 %26, %v22
    %v28 = vpop.permute.xlu0 %27
    %31 = vset.pattern.permute.xlu0 0
    %32 = vperm.xlu0 %31, %v23
    %v33 = vpop.permute.xlu0 %32
    %v36 = vperm.slane %v21, 0
    %v37 = vperm.slane %v21, 4
    %v40 = vperm.slane %v36, 0
    %v41 = vperm.slane %v37, 0
    %v42 = vmul.f32 %v28, %v40
    %v43 = vmul.f32 %v28, %v41
    %v44 = vmul.f32 %v33, %v40
    %v45 = vmul.f32 %v33, %v41
    %46 = vset.pattern.permute.xlu0 1
    %47 = vperm.xlu0 %46, %v22
    %v48 = vpop.permute.xlu0 %47
    %50 = vset.pattern.permute.xlu0 1
    %51 = vperm.xlu0 %50, %v23
    %v52 = vpop.permute.xlu0 %51
    %v54 = vperm.slane %v21, 1
    %v55 = vperm.slane %v21, 5
    %v58 = vperm.slane %v54, 1
    %v59 = vperm.slane %v55, 1
    %v60 = vmul.f32 %v48, %v58
    %v61 = vmul.f32 %v48, %v59
    %v62 = vmul.f32 %v52, %v58
    %v63 = vmul.f32 %v52, %v59
    %v64 = vadd.f32 %v42, %v60
    %v65 = vadd.f32 %v43, %v61
    %v66 = vadd.f32 %v44, %v62
    %v67 = vadd.f32 %v45, %v63
    %68 = vset.pattern.permute.xlu0 2
    %69 = vperm.xlu0 %68, %v22
    %v70 = vpop.permute.xlu0 %69
    %72 = vset.pattern.permute.xlu0 2
    %73 = vperm.xlu0 %72, %v23
    %v74 = vpop.permute.xlu0 %73
    %v76 = vperm.slane %v21, 2
    %v77 = vperm.slane %v21, 6
    %v80 = vperm.slane %v76, 2
    %v81 = vperm.slane %v77, 2
    %v82 = vmul.f32 %v70, %v80
    %v83 = vmul.f32 %v70, %v81
    %v84 = vmul.f32 %v74, %v80
    %v85 = vmul.f32 %v74, %v81
    %v86 = vadd.f32 %v64, %v82
    %v87 = vadd.f32 %v65, %v83
    %v88 = vadd.f32 %v66, %v84
    %v89 = vadd.f32 %v67, %v85
    %90 = vset.pattern.permute.xlu0 3
    %91 = vperm.xlu0 %90, %v22
    %v92 = vpop.permute.xlu0 %91
    %94 = vset.pattern.permute.xlu0 3
    %95 = vperm.xlu0 %94, %v23
    %v96 = vpop.permute.xlu0 %95
    %v98 = vperm.slane %v21, 3
    %v99 = vperm.slane %v21, 7
    %v102 = vperm.slane %v98, 3
    %v103 = vperm.slane %v99, 3
    %v104 = vmul.f32 %v92, %v102
    %v105 = vmul.f32 %v92, %v103
    %v106 = vmul.f32 %v96, %v102
    %v107 = vmul.f32 %v96, %v103
    %v108 = vadd.f32 %v86, %v104
    %v109 = vadd.f32 %v87, %v105
    %v110 = vadd.f32 %v88, %v106
    %v111 = vadd.f32 %v89, %v107
    %v112 = vld [vmem:[%s2] sm:$0xff]
    %v113 = vld [vmem:[%s2 + $0x8] sm:$0xff]
    %115 = vset.pattern.permute.xlu0 0
    %116 = vperm.xlu0 %115, %v112
    %v117 = vpop.permute.xlu0 %116
    %120 = vset.pattern.permute.xlu0 0
    %121 = vperm.xlu0 %120, %v113
    %v122 = vpop.permute.xlu0 %121
    %v124 = vadd.f32 %v108, %v117
    %v125 = vadd.f32 %v109, %v117
    %v126 = vadd.f32 %v110, %v122
    %v127 = vadd.f32 %v111, %v122
    %v128 = vsub.f32 0.0, %v124
    %v129 = vsub.f32 0.0, %v125
    %v130 = vsub.f32 0.0, %v126
    %v131 = vsub.f32 0.0, %v127
    %v132 = vmul.f32 %v128, 1.442695
    %v133 = vpow.pop %v132
    %v134 = vmul.f32 %v129, 1.442695
    %v135 = vpow.pop %v134
    %v136 = vmul.f32 %v130, 1.442695
    %v137 = vpow.pop %v136
    %v138 = vmul.f32 %v131, 1.442695
    %v139 = vpow.pop %v138
    %v140 = vadd.f32 %v133, 1.0
    %v141 = vadd.f32 %v135, 1.0
    %v142 = vadd.f32 %v137, 1.0
    %v143 = vadd.f32 %v139, 1.0
    %v144 = vrcp.pop %v140
    %v145 = vmul.f32 %v140, %v144
    %v146 = vsub.f32 1.0, %v145
    %v147 = vmul.f32 %v144, %v146
    %v148 = vadd.f32 %v144, %v147
    %vm149 = vweird.f32 %v140
    %vm150 = vweird.f32 %v144
    %vm151 = vmor %vm149, %vm150
    %v152 = vsel %vm151, %v144, %v148
    %v153 = vand.u32 2147483647, %v140
    %vm154 = vcmp.eq.f32.partialorder %v153, 8.507059e+37
    %v155 = vand.u32 %v140, 2147483648
    %v156 = vor.u32 1.1754944e-38, %v155
    %v157 = vsel %vm154, %v156, %v152
    %v158 = vmul.f32 1.0, %v157
    %v159 = vrcp.pop %v141
    %v160 = vmul.f32 %v141, %v159
    %v161 = vsub.f32 1.0, %v160
    %v162 = vmul.f32 %v159, %v161
    %v163 = vadd.f32 %v159, %v162
    %vm164 = vweird.f32 %v141
    %vm165 = vweird.f32 %v159
    %vm166 = vmor %vm164, %vm165
    %v167 = vsel %vm166, %v159, %v163
    %v168 = vand.u32 2147483647, %v141
    %vm169 = vcmp.eq.f32.partialorder %v168, 8.507059e+37
    %v170 = vand.u32 %v141, 2147483648
    %v171 = vor.u32 1.1754944e-38, %v170
    %v172 = vsel %vm169, %v171, %v167
    %v173 = vmul.f32 1.0, %v172
    %v174 = vrcp.pop %v142
    %v175 = vmul.f32 %v142, %v174
    %v176 = vsub.f32 1.0, %v175
    %v177 = vmul.f32 %v174, %v176
    %v178 = vadd.f32 %v174, %v177
    %vm179 = vweird.f32 %v142
    %vm180 = vweird.f32 %v174
    %vm181 = vmor %vm179, %vm180
    %v182 = vsel %vm181, %v174, %v178
    %v183 = vand.u32 2147483647, %v142
    %vm184 = vcmp.eq.f32.partialorder %v183, 8.507059e+37
    %v185 = vand.u32 %v142, 2147483648
    %v186 = vor.u32 1.1754944e-38, %v185
    %v187 = vsel %vm184, %v186, %v182
    %v188 = vmul.f32 1.0, %v187
    %v189 = vrcp.pop %v143
    %v190 = vmul.f32 %v143, %v189
    %v191 = vsub.f32 1.0, %v190
    %v192 = vmul.f32 %v189, %v191
    %v193 = vadd.f32 %v189, %v192
    %vm194 = vweird.f32 %v143
    %vm195 = vweird.f32 %v189
    %vm196 = vmor %vm194, %vm195
    %v197 = vsel %vm196, %v189, %v193
    %v198 = vand.u32 2147483647, %v143
    %vm199 = vcmp.eq.f32.partialorder %v198, 8.507059e+37
    %v200 = vand.u32 %v143, 2147483648
    %v201 = vor.u32 1.1754944e-38, %v200
    %v202 = vsel %vm199, %v201, %v197
    %v203 = vmul.f32 1.0, %v202
    %205 = vset.pattern.permute.xlu0 0
    %206 = vperm.xlu0 %205, %v24
    %v207 = vpop.permute.xlu0 %206
    %v209 = vperm.slane %v158, 0
    %v210 = vperm.slane %v173, 0
    %v211 = vmul.f32 %v207, %v209
    %v212 = vmul.f32 %v207, %v210
    %213 = vset.pattern.permute.xlu0 1
    %214 = vperm.xlu0 %213, %v24
    %v215 = vpop.permute.xlu0 %214
    %v217 = vperm.slane %v158, 1
    %v218 = vperm.slane %v173, 1
    %v219 = vmul.f32 %v215, %v217
    %v220 = vmul.f32 %v215, %v218
    %v221 = vadd.f32 %v211, %v219
    %v222 = vadd.f32 %v212, %v220
    %223 = vset.pattern.permute.xlu0 2
    %224 = vperm.xlu0 %223, %v24
    %v225 = vpop.permute.xlu0 %224
    %v227 = vperm.slane %v158, 2
    %v228 = vperm.slane %v173, 2
    %v229 = vmul.f32 %v225, %v227
    %v230 = vmul.f32 %v225, %v228
    %v231 = vadd.f32 %v221, %v229
    %v232 = vadd.f32 %v222, %v230
    %233 = vset.pattern.permute.xlu0 3
    %234 = vperm.xlu0 %233, %v24
    %v235 = vpop.permute.xlu0 %234
    %v237 = vperm.slane %v158, 3
    %v238 = vperm.slane %v173, 3
    %v239 = vmul.f32 %v235, %v237
    %v240 = vmul.f32 %v235, %v238
    %v241 = vadd.f32 %v231, %v239
    %v242 = vadd.f32 %v232, %v240
    %243 = vset.pattern.permute.xlu0 4
    %244 = vperm.xlu0 %243, %v24
    %v245 = vpop.permute.xlu0 %244
    %v247 = vperm.slane %v158, 4
    %v248 = vperm.slane %v173, 4
    %v249 = vmul.f32 %v245, %v247
    %v250 = vmul.f32 %v245, %v248
    %v251 = vadd.f32 %v241, %v249
    %v252 = vadd.f32 %v242, %v250
    %253 = vset.pattern.permute.xlu0 5
    %254 = vperm.xlu0 %253, %v24
    %v255 = vpop.permute.xlu0 %254
    %v257 = vperm.slane %v158, 5
    %v258 = vperm.slane %v173, 5
    %v259 = vmul.f32 %v255, %v257
    %v260 = vmul.f32 %v255, %v258
    %v261 = vadd.f32 %v251, %v259
    %v262 = vadd.f32 %v252, %v260
    %263 = vset.pattern.permute.xlu0 6
    %264 = vperm.xlu0 %263, %v24
    %v265 = vpop.permute.xlu0 %264
    %v267 = vperm.slane %v158, 6
    %v268 = vperm.slane %v173, 6
    %v269 = vmul.f32 %v265, %v267
    %v270 = vmul.f32 %v265, %v268
    %v271 = vadd.f32 %v261, %v269
    %v272 = vadd.f32 %v262, %v270
    %273 = vset.pattern.permute.xlu0 7
    %274 = vperm.xlu0 %273, %v24
    %v275 = vpop.permute.xlu0 %274
    %v277 = vperm.slane %v158, 7
    %v278 = vperm.slane %v173, 7
    %v279 = vmul.f32 %v275, %v277
    %v280 = vmul.f32 %v275, %v278
    %v281 = vadd.f32 %v271, %v279
    %v282 = vadd.f32 %v272, %v280
    %283 = vset.pattern.permute.xlu0 8
    %284 = vperm.xlu0 %283, %v24
    %v285 = vpop.permute.xlu0 %284
    %v287 = vperm.slane %v188, 0
    %v288 = vperm.slane %v203, 0
    %v289 = vmul.f32 %v285, %v287
    %v290 = vmul.f32 %v285, %v288
    %v291 = vadd.f32 %v281, %v289
    %v292 = vadd.f32 %v282, %v290
    %293 = vset.pattern.permute.xlu0 9
    %294 = vperm.xlu0 %293, %v24
    %v295 = vpop.permute.xlu0 %294
    %v297 = vperm.slane %v188, 1
    %v298 = vperm.slane %v203, 1
    %v299 = vmul.f32 %v295, %v297
    %v300 = vmul.f32 %v295, %v298
    %v301 = vadd.f32 %v291, %v299
    %v302 = vadd.f32 %v292, %v300
    %303 = vset.pattern.permute.xlu0 10
    %304 = vperm.xlu0 %303, %v24
    %v305 = vpop.permute.xlu0 %304
    %v307 = vperm.slane %v188, 2
    %v308 = vperm.slane %v203, 2
    %v309 = vmul.f32 %v305, %v307
    %v310 = vmul.f32 %v305, %v308
    %v311 = vadd.f32 %v301, %v309
    %v312 = vadd.f32 %v302, %v310
    %313 = vset.pattern.permute.xlu0 11
    %314 = vperm.xlu0 %313, %v24
    %v315 = vpop.permute.xlu0 %314
    %v317 = vperm.slane %v188, 3
    %v318 = vperm.slane %v203, 3
    %v319 = vmul.f32 %v315, %v317
    %v320 = vmul.f32 %v315, %v318
    %v321 = vadd.f32 %v311, %v319
    %v322 = vadd.f32 %v312, %v320
    %323 = vset.pattern.permute.xlu0 12
    %324 = vperm.xlu0 %323, %v24
    %v325 = vpop.permute.xlu0 %324
    %v327 = vperm.slane %v188, 4
    %v328 = vperm.slane %v203, 4
    %v329 = vmul.f32 %v325, %v327
    %v330 = vmul.f32 %v325, %v328
    %v331 = vadd.f32 %v321, %v329
    %v332 = vadd.f32 %v322, %v330
    %333 = vset.pattern.permute.xlu0 13
    %334 = vperm.xlu0 %333, %v24
    %v335 = vpop.permute.xlu0 %334
    %v337 = vperm.slane %v188, 5
    %v338 = vperm.slane %v203, 5
    %v339 = vmul.f32 %v335, %v337
    %v340 = vmul.f32 %v335, %v338
    %v341 = vadd.f32 %v331, %v339
    %v342 = vadd.f32 %v332, %v340
    %343 = vset.pattern.permute.xlu0 14
    %344 = vperm.xlu0 %343, %v24
    %v345 = vpop.permute.xlu0 %344
    %v347 = vperm.slane %v188, 6
    %v348 = vperm.slane %v203, 6
    %v349 = vmul.f32 %v345, %v347
    %v350 = vmul.f32 %v345, %v348
    %v351 = vadd.f32 %v341, %v349
    %v352 = vadd.f32 %v342, %v350
    %353 = vset.pattern.permute.xlu0 15
    %354 = vperm.xlu0 %353, %v24
    %v355 = vpop.permute.xlu0 %354
    %v357 = vperm.slane %v188, 7
    %v358 = vperm.slane %v203, 7
    %v359 = vmul.f32 %v355, %v357
    %v360 = vmul.f32 %v355, %v358
    %v361 = vadd.f32 %v351, %v359
    %v362 = vadd.f32 %v352, %v360
    %v363 = vld [vmem:[%s4] sm:$0x7]
    %365 = vset.pattern.permute.xlu0 0
    %366 = vperm.xlu0 %365, %v363
    %v367 = vpop.permute.xlu0 %366
    %v369 = vadd.f32 %v361, %v367
    %v370 = vadd.f32 %v362, %v367
    %v373 = vrot.slane %v369, 1
    %v374 = vrot.slane %v370, 1
    %v377 = vmax.f32 %v369, %v373
    %v378 = vmax.f32 %v370, %v374
    %v379 = vrot.slane %v369, 2
    %v380 = vrot.slane %v370, 2
    %v383 = vmax.f32 %v377, %v379
    %v384 = vmax.f32 %v378, %v380
    %v385 = vperm.slane %v383, 0
    %v386 = vperm.slane %v384, 0
    %v387 = vsub.f32 %v369, %v385
    %v388 = vsub.f32 %v370, %v386
    %v389 = vmul.f32 %v387, 1.442695
    %v390 = vpow.pop %v389
    %v391 = vmul.f32 %v388, 1.442695
    %v392 = vpow.pop %v391
    %v395 = vrot.slane %v390, 1
    %v396 = vrot.slane %v392, 1
    %v399 = vadd.f32 %v390, %v395
    %v400 = vadd.f32 %v392, %v396
    %v401 = vrot.slane %v390, 2
    %v402 = vrot.slane %v392, 2
    %v405 = vadd.f32 %v399, %v401
    %v406 = vadd.f32 %v400, %v402
    %v407 = vperm.slane %v405, 0
    %v408 = vperm.slane %v406, 0
    %v409 = vrcp.pop %v407
    %v410 = vmul.f32 %v407, %v409
    %v411 = vsub.f32 1.0, %v410
    %v412 = vmul.f32 %v409, %v411
    %v413 = vadd.f32 %v409, %v412
    %vm414 = vweird.f32 %v407
    %vm415 = vweird.f32 %v409
    %vm416 = vmor %vm414, %vm415
    %v417 = vsel %vm416, %v409, %v413
    %v418 = vand.u32 2147483647, %v407
    %vm419 = vcmp.eq.f32.partialorder %v418, 8.507059e+37
    %v420 = vand.u32 %v407, 2147483648
    %v421 = vor.u32 1.1754944e-38, %v420
    %v422 = vsel %vm419, %v421, %v417
    %v423 = vmul.f32 %v390, %v422
    %v424 = vrcp.pop %v408
    %v425 = vmul.f32 %v408, %v424
    %v426 = vsub.f32 1.0, %v425
    %v427 = vmul.f32 %v424, %v426
    %v428 = vadd.f32 %v424, %v427
    %vm429 = vweird.f32 %v408
    %vm430 = vweird.f32 %v424
    %vm431 = vmor %vm429, %vm430
    %v432 = vsel %vm431, %v424, %v428
    %v433 = vand.u32 2147483647, %v408
    %vm434 = vcmp.eq.f32.partialorder %v433, 8.507059e+37
    %v435 = vand.u32 %v408, 2147483648
    %v436 = vor.u32 1.1754944e-38, %v435
    %v437 = vsel %vm434, %v436, %v432
    %v438 = vmul.f32 %v392, %v437
    %v441 = vrot.slane %v438, 4
    %vm442 = vcmask 1043456
    %v443 = vsel %vm442, %v423, %v441
    %445 = vst [vmem:[#allocation2] sm:$0x77] %v443
    // Predicated region
    $region22: #{tpu_custom_call.1} parent=1 // pred_check
      _
    $region23: #{tpu_custom_call.1} parent=1 // pred_check_branch
      %447 = sbr.rel (0) target = $region25
    $region24: #{tpu_custom_call.1} parent=1 // pred_region
      %449 = vsyncadd [#allocation3], 0
      %s451 = sshll.u32 [#allocation2], 4
      %s452 = int_to_ptr.vmem [resolvable:$true] %s451
      %s453 = sshll.u32 %s5, 4
      %s454 = int_to_ptr.hbm [resolvable:$true] %s453
      %456 = dma.vmem_to_hbm [thread:$0]  %s452, 128, %s454, [#allocation3]
    $region25: #{tpu_custom_call.1} parent=1 // pred_fallthru
      _
    // Predicated region
    $region26: #{tpu_custom_call.1} parent=1 // pred_check
      _
    $region27: #{tpu_custom_call.1} parent=1 // pred_check_branch
      %458 = sbr.rel (0) target = $region29
    $region28: #{tpu_custom_call.1} parent=1 // pred_region
      %460 = dma.done [#allocation3], 128
    $region29: #{tpu_custom_call.1} parent=1 // pred_fallthru
      _
    %461 = vsyncpa [#allocation3], 1

</llo_original>
